<compile_context>
chip_gen: v7x
topology: tpu7x:2x2x1
jax: 0.10.0
libtpu: 0.0.40
codegen_flags: <defaults>
</compile_context>

<pallas_src>
import functools

import jax
import jax.numpy as jnp
from jax import lax
from jax.experimental import pallas as pl
from jax.experimental.pallas import tpu as pltpu


# ----------------------------------------------------------------------------
# Pallas kernel
# ----------------------------------------------------------------------------
def _rope_cache_kernel(inv_freq2_ref, cos_ref, sin_ref, *, block_rows):
    """Compute one (block_rows, dim) tile of the cos/sin caches.

    inv_freq2_ref: (1, dim)  -- cat(inv_freq, inv_freq), so that
                                emb = outer(t, inv_freq2) == cat(freqs, freqs).
    cos_ref/sin_ref: (block_rows, dim) output tiles.
    """
    row0 = pl.program_id(0) * block_rows
    # Sequence positions for this tile, generated on-chip (no HBM iota stream).
    pos = (row0 + lax.broadcasted_iota(jnp.int32, (block_rows, 1), 0)
           ).astype(jnp.float32)                       # (block_rows, 1)
    emb = pos * inv_freq2_ref[...]                     # (block_rows, dim)
    cos_ref[...] = jnp.cos(emb).astype(cos_ref.dtype)  # EUP transcendentals
    sin_ref[...] = jnp.sin(emb).astype(sin_ref.dtype)


# ----------------------------------------------------------------------------
# Wrappers
# ----------------------------------------------------------------------------
def rotary_embedding_cache(inv_freq, seq_len, *, block_rows=512,
                           out_dtype=jnp.float32):
    """Returns (cos, sin), each of shape (seq_len, 1, dim), dim = 2*len(inv_freq)."""
    half = inv_freq.shape[0]
    dim = 2 * half

    # emb = cat(freqs, freqs, -1)  <=>  outer(t, cat(inv_freq, inv_freq)).
    inv_freq2 = jnp.concatenate([inv_freq, inv_freq]).astype(jnp.float32)
    inv_freq2 = inv_freq2.reshape(1, dim)

    tb = min(block_rows, seq_len)          # small seq -> single full block
    grid = (pl.cdiv(seq_len, tb),)

    kernel = functools.partial(_rope_cache_kernel, block_rows=tb)
    out_sds = jax.ShapeDtypeStruct((seq_len, dim), out_dtype)
    out_spec = pl.BlockSpec((tb, dim), lambda i: (i, 0))
    itemsize = jnp.dtype(out_dtype).itemsize

    cos, sin = pl.pallas_call(
        kernel,
        grid=grid,
        in_specs=[pl.BlockSpec((1, dim), lambda i: (0, 0))],
        out_specs=(out_spec, out_spec),
        out_shape=(out_sds, out_sds),
        compiler_params=pltpu.CompilerParams(
            dimension_semantics=("parallel",),          # megacore-shard on v7x
            vmem_limit_bytes=32 * 1024 * 1024,
        ),
        cost_estimate=pl.CostEstimate(
            flops=seq_len * dim,
            transcendentals=2 * seq_len * dim,
            bytes_accessed=2 * seq_len * dim * itemsize + dim * 4,
        ),
    )(inv_freq2)

    # Reference returns emb.cos()[:, None, :] -- pure metadata reshape here.
    return cos.reshape(seq_len, 1, dim), sin.reshape(seq_len, 1, dim)


def rotary_embedding_forward(x, inv_freq, seq_dim=1, seq_len=None,
                             out_dtype=jnp.float32):
    """Mirror of RotaryEmbedding.forward: x is consulted only for seq_len."""
    if seq_len is None:
        seq_len = x.shape[seq_dim]
    # TODO(synk): the PyTorch module caches cos/sin as mutable module state
    # (max_seq_len_cached); here the cache is recomputed functionally, which
    # returns identical values.
    return rotary_embedding_cache(inv_freq, seq_len, out_dtype=out_dtype)


def make_inv_freq(dim, base=10000.0):
    # torch: inv_freq = (1 / base ** (arange(0, dim, 2) / dim)).half()
    # TPU version keeps f32 (fp16 storage has no benefit here).
    return 1.0 / base ** (jnp.arange(0, dim, 2, dtype=jnp.float32) / dim)


# Pure-JAX reference for a sanity check.
def reference_forward(inv_freq, seq_len):
    t = jnp.arange(seq_len, dtype=jnp.float32)
    freqs = jnp.einsum("i,j->ij", t, inv_freq.astype(jnp.float32))
    emb = jnp.concatenate([freqs, freqs], axis=-1)
    return jnp.cos(emb)[:, None, :], jnp.sin(emb)[:, None, :]


if __name__ == "__main__":
    # Small shapes consistent with the module: batch=2, seq=8, 4 heads of dim 32.
    B, S, NUM_HEADS, HEAD_DIM = 2, 8, 4, 32

    key = jax.random.PRNGKey(0)
    # x is only used for its sequence length (seq_dim=1), exactly as in torch.
    x = jax.random.normal(key, (B, S, NUM_HEADS * HEAD_DIM), jnp.float32)
    inv_freq = make_inv_freq(HEAD_DIM)

    cos, sin = rotary_embedding_forward(x, inv_freq, seq_dim=1)
    cos, sin = jax.block_until_ready((cos, sin))

    ref_cos, ref_sin = reference_forward(inv_freq, S)
    assert cos.shape == (S, 1, HEAD_DIM) and sin.shape == (S, 1, HEAD_DIM)
    assert jnp.allclose(cos, ref_cos, atol=1e-4, rtol=1e-4), "cos mismatch"
    assert jnp.allclose(sin, ref_sin, atol=1e-4, rtol=1e-4), "sin mismatch"

    # Also exercise the tiled path (grid > 1, partial handling) at a longer seq.
    S_LONG = 2048
    lcos, lsin = rotary_embedding_cache(inv_freq, S_LONG)
    lcos, lsin = jax.block_until_ready((lcos, lsin))
    rcos, rsin = reference_forward(inv_freq, S_LONG)
    assert jnp.allclose(lcos, rcos, atol=2e-3, rtol=2e-3), "long cos mismatch"
    assert jnp.allclose(lsin, rsin, atol=2e-3, rtol=2e-3), "long sin mismatch"

    print("KERNEL_OK")
</pallas_src>

<mosaic_0001>
module attributes {stable_mosaic.version = 11 : i64} {
  func.func @_rope_cache_kernel(%arg0: i32, %arg1: memref<1x32xf32, #tpu.memory_space<vmem>>, %arg2: memref<8x32xf32, #tpu.memory_space<vmem>>, %arg3: memref<8x32xf32, #tpu.memory_space<vmem>>) attributes {dimension_semantics = [#tpu.dimension_semantics<parallel>], iteration_bounds = array<i64: 1>, scalar_prefetch = 0 : i64, scratch_operands = 0 : i64, tpu.core_type = #tpu.core_type<tc>, window_params = [{pipeline_mode = #tpu.pipeline_mode<synchronous>, transform_indices = @transform_0, window_bounds = array<i64: 1, 32>}, {transform_indices = @transform_1, window_bounds = array<i64: 8, 32>}, {transform_indices = @transform_2, window_bounds = array<i64: 8, 32>}]} {
    %c8_i32 = arith.constant 8 : i32
    %0 = arith.muli %arg0, %c8_i32 : i32
    %1 = tpu.iota {dimensions = array<i32: 0>} : vector<8x1xi32>
    %2 = vector.broadcast %0 : i32 to vector<8x1xi32>
    %3 = arith.addi %2, %1 : vector<8x1xi32>
    %4 = arith.sitofp %3 : vector<8x1xi32> to vector<8x1xf32>
    %c0 = arith.constant 0 : index
    %c0_0 = arith.constant 0 : index
    %5 = vector.load %arg1[%c0, %c0_0] : memref<1x32xf32, #tpu.memory_space<vmem>>, vector<1x32xf32>
    %6 = vector.broadcast %4 : vector<8x1xf32> to vector<8x32xf32>
    %7 = vector.broadcast %5 : vector<1x32xf32> to vector<8x32xf32>
    %8 = arith.mulf %6, %7 : vector<8x32xf32>
    %9 = math.cos %8 : vector<8x32xf32>
    %c0_1 = arith.constant 0 : index
    %c0_2 = arith.constant 0 : index
    %10 = vector.load %arg2[%c0_1, %c0_2] : memref<8x32xf32, #tpu.memory_space<vmem>>, vector<8x32xf32>
    tpu.vector_store %arg2[%c0_1, %c0_2], %9 {strides = array<i32>} : memref<8x32xf32, #tpu.memory_space<vmem>>, vector<8x32xf32>,
    %11 = math.sin %8 : vector<8x32xf32>
    %c0_3 = arith.constant 0 : index
    %c0_4 = arith.constant 0 : index
    %12 = vector.load %arg3[%c0_3, %c0_4] : memref<8x32xf32, #tpu.memory_space<vmem>>, vector<8x32xf32>
    tpu.vector_store %arg3[%c0_3, %c0_4], %11 {strides = array<i32>} : memref<8x32xf32, #tpu.memory_space<vmem>>, vector<8x32xf32>,
    return
  }
  func.func @transform_0(%arg0: i32) -> (i32, i32) {
    %c0_i32 = arith.constant 0 : i32
    %c0_i32_0 = arith.constant 0 : i32
    %c0_i32_1 = arith.constant 0 : i32
    return %c0_i32, %c0_i32_0 : i32, i32
  }
  func.func @transform_1(%arg0: i32) -> (i32, i32) {
    %c0_i32 = arith.constant 0 : i32
    %c0_i32_0 = arith.constant 0 : i32
    return %arg0, %c0_i32 : i32, i32
  }
  func.func @transform_2(%arg0: i32) -> (i32, i32) {
    %c0_i32 = arith.constant 0 : i32
    %c0_i32_0 = arith.constant 0 : i32
    return %arg0, %c0_i32 : i32, i32
  }
}

</mosaic_0001>

<llo_original>
// kernel: tpu_custom_call.1
$region0: #{tpu_custom_call.1}
  #allocation0 [shape = 'u32[]', space=smem, size = 0x4, offset = 0x4, fixed_abs, tag = 'smem constant byte address 0x4 - core index']
  #allocation1 [shape = 'u32[144,128]{1,0:T(1,128)}', space=vmem, size = 0x12000, scoped, tag = 'internal scratch']
  %s0 = inlined_call_operand.hbm [shape: f32[1,32], index: 0, kind: input, shape index: {}]
  %s1 = inlined_call_operand.hbm [shape: f32[8,32], index: 1, kind: output, shape index: {0}]
  %s2 = inlined_call_operand.hbm [shape: f32[8,32], index: 2, kind: output, shape index: {1}]
  %3 = xla_tuple %s1, %s2
  %s4 = sld [smem:[#allocation0]]
  $region26: #{tpu_custom_call.1} parent=0
    _
  %s6 = ssub.s32 1, %s4
  %s7 = scalar_select 0, %s6, %s4
  $region1: #{tpu_custom_call.1} parent=0
    #allocation2 [shape = 'u8[512]{0}', space=vmem, size = 0x400, scoped, tag = 'input window, operand 0, single buffered']
    #allocation3 [shape = 's32[1]{0}', space=sflag, size = 0x4, scoped, tag = 'scoped memory for tpu_custom_call.1']
    #allocation4 [shape = 's32[1]{0}', space=sflag, size = 0x4, scoped, tag = 'scoped memory for tpu_custom_call.1']
    #allocation5 [shape = 'u8[4096]{0}', space=vmem, size = 0x1000, scoped, tag = 'output window, operand 0, single buffered']
    #allocation6 [shape = 'u8[4096]{0}', space=vmem, size = 0x1000, scoped, tag = 'output window, operand 1, single buffered']
    #allocation7 [shape = 's32[1]{0}', space=sflag, size = 0x4, scoped, tag = 'scoped memory for tpu_custom_call.1']
    %8 = vsyncpa [#allocation3], 0
    %9 = vsyncpa [#allocation4], 0
    %10 = vsyncpa [#allocation7], 0
    // Predicated region
    $region2: #{tpu_custom_call.1} parent=1 // pred_check
      _
    $region3: #{tpu_custom_call.1} parent=1 // pred_check_branch
      %12 = sbr.rel (0) target = $region5
    $region4: #{tpu_custom_call.1} parent=1 // pred_region
      %s14 = ssub.s32 16, 16
      %15 = vsyncadd [#allocation3], %s14
      %s17 = sshll.u32 [#allocation2], 4
      %s18 = int_to_ptr.vmem [resolvable:$true] %s17
      %20 = dma.hbm_to_vmem [thread:$0]  %s0, 16, %s18, [#allocation3]
    $region5: #{tpu_custom_call.1} parent=1 // pred_fallthru
      _
    // Predicated region
    $region6: #{tpu_custom_call.1} parent=1 // pred_check
      _
    $region7: #{tpu_custom_call.1} parent=1 // pred_check_branch
      %22 = sbr.rel (0) target = $region9
    $region8: #{tpu_custom_call.1} parent=1 // pred_region
      %23 = dma.done [#allocation3], 16
    $region9: #{tpu_custom_call.1} parent=1 // pred_fallthru
      _
    %s24 = smul.u32 0, 8
    %v25 = vlaneseq
    %v26 = vshrl.u32 %v25, 7
    %v27 = vstv %s24
    %v28 = vadd.s32 %v27, %v26
    %v29 = vcvt.s32.f32 %v28
    %v30 = vld [vmem:[#allocation2] sm:$0x1]
    %v32 = vlaneseq
    %v33 = vshrl.u32 %v32, 7
    %v34 = vsub.s32 0, %v33
    %v35 = vrot.slane %v30, %v34
    %v37 = vmul.f32 %v29, %v35
    %v38 = vand.u32 2147483647, %v37
    %vm39 = vcmp.le.f32.partialorder %v38, 0.7853982
    %vm40 = vcmp.lt.s32.totalorder %v37, 0
    %v41 = vand.u32 %v37, 2139095040
    %v42 = vshrl.u32 %v41, 23
    %v43 = vsub.s32 %v42, 127
    %v44 = vand.u32 2147483647, %v37
    %v45 = vand.u32 %v44, 8388607
    %v46 = vor.u32 %v45, 8388608
    %v47 = vsub.s32 0, %v46
    %v48 = vadd.s32 %v43, 1
    %vm49 = vcmp.gt.s32.totalorder %v48, 0
    %v50 = vsel %vm49, %v48, 0
    %v51 = vshrl.u32 %v50, 5
    %v52 = vand.u32 %v50, 31
    %v53 = vsub.s32 32, %v52
    %v54 = vshrl.u32 683565275, %v53
    %v55 = vshll.u32 683565275, %v52
    %v56 = vshrl.u32 2475754826, %v53
    %v57 = vor.u32 %v55, %v56
    %v58 = vshll.u32 2475754826, %v52
    %v59 = vshrl.u32 2131351028, %v53
    %v60 = vor.u32 %v58, %v59
    %v61 = vshll.u32 2131351028, %v52
    %v62 = vshrl.u32 2102212464, %v53
    %v63 = vor.u32 %v61, %v62
    %v64 = vshll.u32 2102212464, %v52
    %v65 = vshrl.u32 920167782, %v53
    %v66 = vor.u32 %v64, %v65
    %v67 = vshll.u32 920167782, %v52
    %v68 = vshrl.u32 1326507024, %v53
    %v69 = vor.u32 %v67, %v68
    %vm70 = vcmp.lt.s32.totalorder %v51, 1
    %vm71 = vcmp.lt.s32.totalorder %v51, 2
    %vm72 = vcmp.lt.s32.totalorder %v51, 3
    %vm73 = vcmp.lt.s32.totalorder %v51, 4
    %v74 = vsel %vm70, %v54, %v57
    %v75 = vsel %vm73, %v63, 2102212464
    %v76 = vsel %vm72, %v60, %v75
    %v77 = vsel %vm71, %v74, %v76
    %v78 = vsel %vm70, %v57, %v60
    %v79 = vsel %vm73, %v66, 920167782
    %v80 = vsel %vm72, %v63, %v79
    %v81 = vsel %vm71, %v78, %v80
    %v82 = vsel %vm70, %v60, %v63
    %v83 = vsel %vm73, %v69, 1326507024
    %v84 = vsel %vm72, %v66, %v83
    %v85 = vsel %vm71, %v82, %v84
    %v86 = vshll.u32 %v46, 8
    %v87 = vmul.u32.u64.compose %v86, %v85
    %v88 = vextract.low.u32 %v87
    %v89 = vextract.high.u32 %v87
    %v90 = vmul.u32.u64.compose %v86, %v81
    %v91 = vextract.low.u32 %v90
    %v92 = vextract.high.u32 %v90
    %v93 = vmul.u32 %v86, %v77
    %v94 = vadd.s32 %v89, %v91
    %vm95 = vc.u32 %v89, %v91
    %v96 = vadd.s32 %v92, 1
    %v97 = vsel %vm95, %v96, %v92
    %v98 = vadd.s32 %v93, %v97
    %v99 = vadd.s32 %v98, 536870912
    %v100 = vshrl.u32 %v99, 30
    %v101 = vshll.u32 %v100, 30
    %v102 = vsub.s32 %v98, %v101
    %vm103 = vcmp.lt.s32.totalorder %v102, 0
    %v104 = vsub.s32 0, %v102
    %v105 = vsel %vm103, %v104, %v102
    %v106 = vclz %v105
    %v107 = vsub.s32 %v106, 2
    %vm108 = vcmp.gt.s32.totalorder 0, %v107
    %v109 = vsel %vm108, 0, %v107
    %v110 = vsub.s32 32, %v109
    %v111 = vshll.u32 %v102, %v109
    %v112 = vshrl.u32 %v94, %v110
    %v113 = vor.u32 %v111, %v112
    %v114 = vsub.s32 4294967266, %v109
    %v115 = vadd.s32 %v114, 127
    %v116 = vshll.u32 %v115, 23
    %v117 = vor.u32 4788187, %v116
    %v118 = vand.u32 2147483647, %v117
    %v120 = vcvt.s32.f32 %v113
    %v121 = vmul.f32 %v120, %v118
    %v122 = vxor.u32 %v121, 2147483648
    %v123 = vsel %vm40, %v122, %v121
    %v124 = vsub.s32 4, %v100
    %v125 = vsel %vm40, %v124, %v100
    %v126 = vsel %vm39, %v37, %v123
    %v127 = vsel %vm39, 0, %v125
    %v128 = vcosq.f32.pop %v126
    %v129 = vsinq.f32.pop %v126
    %vm130 = vweird.f32 %v37
    %v131 = vand.u32 %v127, 3
    %vm132 = vcmp.lt.s32.totalorder %v131, 2
    %vm133 = vcmp.eq.s32.totalorder %v131, 0
    %v134 = vxor.u32 %v129, 2147483648
    %v135 = vsel %vm133, %v128, %v134
    %vm136 = vcmp.eq.s32.totalorder %v131, 2
    %v137 = vxor.u32 %v128, 2147483648
    %v138 = vsel %vm136, %v137, %v129
    %v139 = vsel %vm132, %v135, %v138
    %v140 = vsel %vm130, nan, %v139
    %vm141 = vcmask 261120
    %142 = vst.msk [vmem:[#allocation5] sm:$0xff] %vm141, %v140
    %v143 = vand.u32 2147483647, %v37
    %vm144 = vcmp.le.f32.partialorder %v143, 0.7853982
    %vm145 = vcmp.lt.s32.totalorder %v37, 0
    %v146 = vand.u32 %v37, 2139095040
    %v147 = vshrl.u32 %v146, 23
    %v148 = vsub.s32 %v147, 127
    %v149 = vand.u32 2147483647, %v37
    %v150 = vand.u32 %v149, 8388607
    %v151 = vor.u32 %v150, 8388608
    %v152 = vsub.s32 0, %v151
    %v153 = vadd.s32 %v148, 1
    %vm154 = vcmp.gt.s32.totalorder %v153, 0
    %v155 = vsel %vm154, %v153, 0
    %v156 = vshrl.u32 %v155, 5
    %v157 = vand.u32 %v155, 31
    %v158 = vsub.s32 32, %v157
    %v159 = vshrl.u32 683565275, %v158
    %v160 = vshll.u32 683565275, %v157
    %v161 = vshrl.u32 2475754826, %v158
    %v162 = vor.u32 %v160, %v161
    %v163 = vshll.u32 2475754826, %v157
    %v164 = vshrl.u32 2131351028, %v158
    %v165 = vor.u32 %v163, %v164
    %v166 = vshll.u32 2131351028, %v157
    %v167 = vshrl.u32 2102212464, %v158
    %v168 = vor.u32 %v166, %v167
    %v169 = vshll.u32 2102212464, %v157
    %v170 = vshrl.u32 920167782, %v158
    %v171 = vor.u32 %v169, %v170
    %v172 = vshll.u32 920167782, %v157
    %v173 = vshrl.u32 1326507024, %v158
    %v174 = vor.u32 %v172, %v173
    %vm175 = vcmp.lt.s32.totalorder %v156, 1
    %vm176 = vcmp.lt.s32.totalorder %v156, 2
    %vm177 = vcmp.lt.s32.totalorder %v156, 3
    %vm178 = vcmp.lt.s32.totalorder %v156, 4
    %v179 = vsel %vm175, %v159, %v162
    %v180 = vsel %vm178, %v168, 2102212464
    %v181 = vsel %vm177, %v165, %v180
    %v182 = vsel %vm176, %v179, %v181
    %v183 = vsel %vm175, %v162, %v165
    %v184 = vsel %vm178, %v171, 920167782
    %v185 = vsel %vm177, %v168, %v184
    %v186 = vsel %vm176, %v183, %v185
    %v187 = vsel %vm175, %v165, %v168
    %v188 = vsel %vm178, %v174, 1326507024
    %v189 = vsel %vm177, %v171, %v188
    %v190 = vsel %vm176, %v187, %v189
    %v191 = vshll.u32 %v151, 8
    %v192 = vmul.u32.u64.compose %v191, %v190
    %v193 = vextract.low.u32 %v192
    %v194 = vextract.high.u32 %v192
    %v195 = vmul.u32.u64.compose %v191, %v186
    %v196 = vextract.low.u32 %v195
    %v197 = vextract.high.u32 %v195
    %v198 = vmul.u32 %v191, %v182
    %v199 = vadd.s32 %v194, %v196
    %vm200 = vc.u32 %v194, %v196
    %v201 = vadd.s32 %v197, 1
    %v202 = vsel %vm200, %v201, %v197
    %v203 = vadd.s32 %v198, %v202
    %v204 = vadd.s32 %v203, 536870912
    %v205 = vshrl.u32 %v204, 30
    %v206 = vshll.u32 %v205, 30
    %v207 = vsub.s32 %v203, %v206
    %vm208 = vcmp.lt.s32.totalorder %v207, 0
    %v209 = vsub.s32 0, %v207
    %v210 = vsel %vm208, %v209, %v207
    %v211 = vclz %v210
    %v212 = vsub.s32 %v211, 2
    %vm213 = vcmp.gt.s32.totalorder 0, %v212
    %v214 = vsel %vm213, 0, %v212
    %v215 = vsub.s32 32, %v214
    %v216 = vshll.u32 %v207, %v214
    %v217 = vshrl.u32 %v199, %v215
    %v218 = vor.u32 %v216, %v217
    %v219 = vsub.s32 4294967266, %v214
    %v220 = vadd.s32 %v219, 127
    %v221 = vshll.u32 %v220, 23
    %v222 = vor.u32 4788187, %v221
    %v223 = vand.u32 2147483647, %v222
    %v225 = vcvt.s32.f32 %v218
    %v226 = vmul.f32 %v225, %v223
    %v227 = vxor.u32 %v226, 2147483648
    %v228 = vsel %vm145, %v227, %v226
    %v229 = vsub.s32 4, %v205
    %v230 = vsel %vm145, %v229, %v205
    %v231 = vsel %vm144, %v37, %v228
    %v232 = vsel %vm144, 0, %v230
    %v233 = vcosq.f32.pop %v231
    %v234 = vsinq.f32.pop %v231
    %vm235 = vweird.f32 %v37
    %v236 = vadd.s32 %v232, 3
    %v237 = vand.u32 %v236, 3
    %vm238 = vcmp.lt.s32.totalorder %v237, 2
    %vm239 = vcmp.eq.s32.totalorder %v237, 0
    %v240 = vxor.u32 %v234, 2147483648
    %v241 = vsel %vm239, %v233, %v240
    %vm242 = vcmp.eq.s32.totalorder %v237, 2
    %v243 = vxor.u32 %v233, 2147483648
    %v244 = vsel %vm242, %v243, %v234
    %v245 = vsel %vm238, %v241, %v244
    %v246 = vsel %vm235, nan, %v245
    %247 = vst.msk [vmem:[#allocation6] sm:$0xff] %vm141, %v246
    // Predicated region
    $region10: #{tpu_custom_call.1} parent=1 // pred_check
      _
    $region11: #{tpu_custom_call.1} parent=1 // pred_check_branch
      %249 = sbr.rel (0) target = $region13
    $region12: #{tpu_custom_call.1} parent=1 // pred_region
      %s251 = ssub.s32 128, 128
      %252 = vsyncadd [#allocation4], %s251
      %s254 = sshll.u32 [#allocation5], 4
      %s255 = int_to_ptr.vmem [resolvable:$true] %s254
      %257 = dma.vmem_to_hbm [thread:$0]  %s255, 128, %s1, [#allocation4]
    $region13: #{tpu_custom_call.1} parent=1 // pred_fallthru
      _
    // Predicated region
    $region14: #{tpu_custom_call.1} parent=1 // pred_check
      _
    $region15: #{tpu_custom_call.1} parent=1 // pred_check_branch
      %259 = sbr.rel (0) target = $region17
    $region16: #{tpu_custom_call.1} parent=1 // pred_region
      %s261 = ssub.s32 128, 128
      %262 = vsyncadd [#allocation7], %s261
      %s264 = sshll.u32 [#allocation6], 4
      %s265 = int_to_ptr.vmem [resolvable:$true] %s264
      %267 = dma.vmem_to_hbm [thread:$0]  %s265, 128, %s2, [#allocation7]
    $region17: #{tpu_custom_call.1} parent=1 // pred_fallthru
      _
    // Predicated region
    $region18: #{tpu_custom_call.1} parent=1 // pred_check
      _
    $region19: #{tpu_custom_call.1} parent=1 // pred_check_branch
      %269 = sbr.rel (0) target = $region21
    $region20: #{tpu_custom_call.1} parent=1 // pred_region
      %270 = dma.done [#allocation4], 128
    $region21: #{tpu_custom_call.1} parent=1 // pred_fallthru
      _
    // Predicated region
    $region22: #{tpu_custom_call.1} parent=1 // pred_check
      _
    $region23: #{tpu_custom_call.1} parent=1 // pred_check_branch
      %272 = sbr.rel (0) target = $region25
    $region24: #{tpu_custom_call.1} parent=1 // pred_region
      %273 = dma.done [#allocation7], 128
    $region25: #{tpu_custom_call.1} parent=1 // pred_fallthru
      _
    %274 = vsyncpa [#allocation3], 1
    %275 = vsyncpa [#allocation4], 1
    %276 = vsyncpa [#allocation7], 1

</llo_original>
